<compile_context>
chip_gen: v7x
topology: tpu7x:2x2x1
jax: 0.10.0
libtpu: 0.0.40
codegen_flags: <defaults>
</compile_context>

<pallas_src>
import jax
import jax.numpy as jnp
from jax.experimental import pallas as pl
from jax.experimental.pallas import tpu as pltpu

LANES = 128   # padded output / lane width
KPAD = 8      # padded contracting dim (minimum f32 sublane tile)
BIAS_LANE = 7 # lane of x carrying the constant 1.0 used to fold in layer0's bias


def _mlp_kernel(x_ref, w_ref, o_ref):
    """Entire 4-matmul + ReLU chain fused in a single VMEM-resident kernel.

    x_ref: (B, 128) f32  -- cols 0..5 = input features, col 7 = 1.0 (bias lane)
    w_ref: (4, 8, 128) f32 packed weights:
        [0] = layer0 W^T (rows 0..5) with bias in row 7
        [1] = layer2[0] W^T (rows 0..5, cols 0..2)
        [2] = layer2[2] W^T (rows 0..2, cols 0..5)
        [3] = layer1 W^T (rows 0..5)
    """
    x = x_ref[...]                      # (B, 128)
    xk = x[:, :KPAD]                    # (B, 8) narrow contracting slice

    # layer0: Linear(6->6) + bias (folded via ones lane), then ReLU
    z = jnp.dot(xk, w_ref[0], preferred_element_type=jnp.float32)
    z = jnp.maximum(z, 0.0)             # (B, 128), data in cols 0..5

    # layer2: Linear(6->3) -> ReLU -> Linear(3->6), then outer ReLU
    h = jnp.dot(z[:, :KPAD], w_ref[1], preferred_element_type=jnp.float32)
    h = jnp.maximum(h, 0.0)
    z = jnp.dot(h[:, :KPAD], w_ref[2], preferred_element_type=jnp.float32)
    z = jnp.maximum(z, 0.0)

    # layer1: Linear(6->6, no bias), then ReLU
    z = jnp.dot(z[:, :KPAD], w_ref[3], preferred_element_type=jnp.float32)
    z = jnp.maximum(z, 0.0)

    o_ref[...] = z.astype(o_ref.dtype)


def pack_params(params):
    """One-time packing: all weights (PyTorch (out,in) convention) -> (4,8,128)."""
    w = jnp.zeros((4, KPAD, LANES), jnp.float32)
    w = w.at[0, :6, :6].set(params["w0"].T)          # layer0 W^T
    w = w.at[0, BIAS_LANE, :6].set(params["b0"])     # layer0 bias (row 7)
    w = w.at[1, :6, :3].set(params["w2a"].T)         # layer2[0] W^T
    w = w.at[2, :3, :6].set(params["w2b"].T)         # layer2[2] W^T
    w = w.at[3, :6, :6].set(params["w1"].T)          # layer1 W^T
    return w


def model_forward(x, packed_w):
    """x: (B, 6) float32. packed_w: output of pack_params (cached across calls)."""
    B = x.shape[0]
    xp = jnp.zeros((B, LANES), jnp.float32)
    xp = xp.at[:, :6].set(x).at[:, BIAS_LANE].set(1.0)

    full = lambda shape: pl.BlockSpec(shape, lambda: tuple(0 for _ in shape))

    out_padded = pl.pallas_call(
        _mlp_kernel,
        out_shape=jax.ShapeDtypeStruct((B, LANES), jnp.float32),
        grid_spec=pltpu.PrefetchScalarGridSpec(
            num_scalar_prefetch=0,
            grid=(),
            in_specs=[
                full((B, LANES)),
                full((4, KPAD, LANES)),
            ],
            out_specs=full((B, LANES)),
        ),
    )(xp, packed_w)

    return out_padded[:, :6]


def init_params(key):
    """Deterministic synthetic init matching the PyTorch module's shapes."""
    ks = jax.random.split(key, 5)
    scale = 0.4
    return {
        "w0": scale * jax.random.normal(ks[0], (6, 6), jnp.float32),   # layer0 weight (out,in)
        "b0": scale * jax.random.normal(ks[1], (6,), jnp.float32),     # layer0 bias
        "w2a": scale * jax.random.normal(ks[2], (3, 6), jnp.float32),  # layer2[0] weight
        "w2b": scale * jax.random.normal(ks[3], (6, 3), jnp.float32),  # layer2[2] weight
        "w1": scale * jax.random.normal(ks[4], (6, 6), jnp.float32),   # layer1 weight
    }


def reference_forward(x, p):
    relu = lambda v: jnp.maximum(v, 0.0)
    z = relu(x @ p["w0"].T + p["b0"])
    z = relu(relu(z @ p["w2a"].T) @ p["w2b"].T)
    z = relu(z @ p["w1"].T)
    return z


if __name__ == "__main__":
    key = jax.random.PRNGKey(0)
    k_x, k_p = jax.random.split(key)
    x = jax.random.normal(k_x, (8, 6), jnp.float32)   # matches Model.get_input
    params = init_params(k_p)

    packed_w = jax.block_until_ready(pack_params(params))  # hoisted: pad/pack once

    out = model_forward(x, packed_w)
    out = jax.block_until_ready(out)

    ref = reference_forward(x, params)
    assert out.shape == (8, 6)
    assert jnp.allclose(out, ref, atol=1e-5, rtol=1e-5), "mismatch vs pure-JAX reference"

    print("KERNEL_OK")
</pallas_src>

<mosaic_0001>
module attributes {stable_mosaic.version = 11 : i64} {
  func.func @_mlp_kernel(%arg0: memref<8x128xf32, #tpu.memory_space<vmem>>, %arg1: memref<4x8x128xf32, #tpu.memory_space<vmem>>, %arg2: memref<8x128xf32, #tpu.memory_space<vmem>>) attributes {dimension_semantics = [], scalar_prefetch = 0 : i64, scratch_operands = 0 : i64, tpu.core_type = #tpu.core_type<tc>} {
    %c0 = arith.constant 0 : index
    %c0_0 = arith.constant 0 : index
    %0 = vector.load %arg0[%c0, %c0_0] : memref<8x128xf32, #tpu.memory_space<vmem>>, vector<8x128xf32>
    %1 = vector.extract_strided_slice %0 {offsets = [0, 0], sizes = [8, 8], strides = [1, 1]} : vector<8x128xf32> to vector<8x8xf32>
    %c0_1 = arith.constant 0 : index
    %c0_2 = arith.constant 0 : index
    %c0_3 = arith.constant 0 : index
    %2 = vector.load %arg1[%c0_1, %c0_2, %c0_3] : memref<4x8x128xf32, #tpu.memory_space<vmem>>, vector<1x8x128xf32>
    %3 = vector.shape_cast %2 : vector<1x8x128xf32> to vector<8x128xf32>
    %cst = arith.constant dense<0.000000e+00> : vector<8x128xf32>
    %4 = tpu.matmul %1, %3, %cst {dimension_numbers = #tpu.dot_dimension_numbers<[1], [0], [0], [1], [0, 0, 1, 1], [], []>} : vector<8x8xf32>, vector<8x128xf32>, vector<8x128xf32> -> vector<8x128xf32>
    %cst_4 = arith.constant 0.000000e+00 : f32
    %5 = vector.broadcast %cst_4 : f32 to vector<8x128xf32>
    %6 = arith.maximumf %4, %5 : vector<8x128xf32>
    %7 = vector.extract_strided_slice %6 {offsets = [0, 0], sizes = [8, 8], strides = [1, 1]} : vector<8x128xf32> to vector<8x8xf32>
    %c1 = arith.constant 1 : index
    %c0_5 = arith.constant 0 : index
    %c0_6 = arith.constant 0 : index
    %8 = vector.load %arg1[%c1, %c0_5, %c0_6] : memref<4x8x128xf32, #tpu.memory_space<vmem>>, vector<1x8x128xf32>
    %9 = vector.shape_cast %8 : vector<1x8x128xf32> to vector<8x128xf32>
    %cst_7 = arith.constant dense<0.000000e+00> : vector<8x128xf32>
    %10 = tpu.matmul %7, %9, %cst_7 {dimension_numbers = #tpu.dot_dimension_numbers<[1], [0], [0], [1], [0, 0, 1, 1], [], []>} : vector<8x8xf32>, vector<8x128xf32>, vector<8x128xf32> -> vector<8x128xf32>
    %cst_8 = arith.constant 0.000000e+00 : f32
    %11 = vector.broadcast %cst_8 : f32 to vector<8x128xf32>
    %12 = arith.maximumf %10, %11 : vector<8x128xf32>
    %13 = vector.extract_strided_slice %12 {offsets = [0, 0], sizes = [8, 8], strides = [1, 1]} : vector<8x128xf32> to vector<8x8xf32>
    %c2 = arith.constant 2 : index
    %c0_9 = arith.constant 0 : index
    %c0_10 = arith.constant 0 : index
    %14 = vector.load %arg1[%c2, %c0_9, %c0_10] : memref<4x8x128xf32, #tpu.memory_space<vmem>>, vector<1x8x128xf32>
    %15 = vector.shape_cast %14 : vector<1x8x128xf32> to vector<8x128xf32>
    %cst_11 = arith.constant dense<0.000000e+00> : vector<8x128xf32>
    %16 = tpu.matmul %13, %15, %cst_11 {dimension_numbers = #tpu.dot_dimension_numbers<[1], [0], [0], [1], [0, 0, 1, 1], [], []>} : vector<8x8xf32>, vector<8x128xf32>, vector<8x128xf32> -> vector<8x128xf32>
    %cst_12 = arith.constant 0.000000e+00 : f32
    %17 = vector.broadcast %cst_12 : f32 to vector<8x128xf32>
    %18 = arith.maximumf %16, %17 : vector<8x128xf32>
    %19 = vector.extract_strided_slice %18 {offsets = [0, 0], sizes = [8, 8], strides = [1, 1]} : vector<8x128xf32> to vector<8x8xf32>
    %c3 = arith.constant 3 : index
    %c0_13 = arith.constant 0 : index
    %c0_14 = arith.constant 0 : index
    %20 = vector.load %arg1[%c3, %c0_13, %c0_14] : memref<4x8x128xf32, #tpu.memory_space<vmem>>, vector<1x8x128xf32>
    %21 = vector.shape_cast %20 : vector<1x8x128xf32> to vector<8x128xf32>
    %cst_15 = arith.constant dense<0.000000e+00> : vector<8x128xf32>
    %22 = tpu.matmul %19, %21, %cst_15 {dimension_numbers = #tpu.dot_dimension_numbers<[1], [0], [0], [1], [0, 0, 1, 1], [], []>} : vector<8x8xf32>, vector<8x128xf32>, vector<8x128xf32> -> vector<8x128xf32>
    %cst_16 = arith.constant 0.000000e+00 : f32
    %23 = vector.broadcast %cst_16 : f32 to vector<8x128xf32>
    %24 = arith.maximumf %22, %23 : vector<8x128xf32>
    %c0_17 = arith.constant 0 : index
    %c0_18 = arith.constant 0 : index
    %25 = vector.load %arg2[%c0_17, %c0_18] : memref<8x128xf32, #tpu.memory_space<vmem>>, vector<8x128xf32>
    tpu.vector_store %arg2[%c0_17, %c0_18], %24 {strides = array<i32>} : memref<8x128xf32, #tpu.memory_space<vmem>>, vector<8x128xf32>,
    return
  }
}

</mosaic_0001>

<llo_original>
// kernel: tpu_custom_call.1
$region0: #{tpu_custom_call.1}
  #allocation0 [shape = 'u32[]', space=smem, size = 0x4, offset = 0x4, fixed_abs, tag = 'smem constant byte address 0x4 - core index']
  #allocation1 [shape = 'u32[144,128]{1,0:T(1,128)}', space=vmem, size = 0x12000, scoped, tag = 'internal scratch']
  %s0 = inlined_call_operand.hbm [shape: f32[8,128], index: 0, kind: input, shape index: {}]
  %s1 = inlined_call_operand.hbm [shape: f32[4,8,128], index: 1, kind: input, shape index: {}]
  %s2 = inlined_call_operand.hbm [shape: f32[8,128], index: 2, kind: output, shape index: {}]
  %s3 = sld [smem:[#allocation0]]
  $region26: #{tpu_custom_call.1} parent=0
    _
  %s5 = ssub.s32 1, %s3
  %s6 = scalar_select 0, %s5, %s3
  $region1: #{tpu_custom_call.1} parent=0
    #allocation2 [shape = 'u8[4096]{0}', space=vmem, size = 0x1000, scoped, tag = 'input window, operand 0, single buffered']
    #allocation3 [shape = 's32[1]{0}', space=sflag, size = 0x4, scoped, tag = 'scoped memory for tpu_custom_call.1']
    #allocation4 [shape = 's32[1]{0}', space=sflag, size = 0x4, scoped, tag = 'scoped memory for tpu_custom_call.1']
    #allocation5 [shape = 'u8[16384]{0}', space=vmem, size = 0x4000, scoped, tag = 'input window, operand 1, single buffered']
    #allocation6 [shape = 's32[1]{0}', space=sflag, size = 0x4, scoped, tag = 'scoped memory for tpu_custom_call.1']
    #allocation7 [shape = 'u8[4096]{0}', space=vmem, size = 0x1000, scoped, tag = 'output window, operand 0, single buffered']
    %7 = vsyncpa [#allocation3], 0
    %8 = vsyncpa [#allocation6], 0
    %9 = vsyncpa [#allocation4], 0
    // Predicated region
    $region2: #{tpu_custom_call.1} parent=1 // pred_check
      _
    $region3: #{tpu_custom_call.1} parent=1 // pred_check_branch
      %11 = sbr.rel (0) target = $region5
    $region4: #{tpu_custom_call.1} parent=1 // pred_region
      %s13 = ssub.s32 128, 128
      %14 = vsyncadd [#allocation3], %s13
      %s16 = sshll.u32 [#allocation2], 4
      %s17 = int_to_ptr.vmem [resolvable:$true] %s16
      %19 = dma.hbm_to_vmem [thread:$0]  %s0, 128, %s17, [#allocation3]
    $region5: #{tpu_custom_call.1} parent=1 // pred_fallthru
      _
    // Predicated region
    $region6: #{tpu_custom_call.1} parent=1 // pred_check
      _
    $region7: #{tpu_custom_call.1} parent=1 // pred_check_branch
      %21 = sbr.rel (0) target = $region9
    $region8: #{tpu_custom_call.1} parent=1 // pred_region
      %s23 = ssub.s32 512, 512
      %24 = vsyncadd [#allocation6], %s23
      %s25 = sshll.u32 [#allocation5], 4
      %s26 = int_to_ptr.vmem [resolvable:$true] %s25
      %31 = dma.hbm_to_vmem [thread:$0]  %s1, 512, %s26, [#allocation6], 128, 128, 8
    $region9: #{tpu_custom_call.1} parent=1 // pred_fallthru
      _
    // Predicated region
    $region10: #{tpu_custom_call.1} parent=1 // pred_check
      _
    $region11: #{tpu_custom_call.1} parent=1 // pred_check_branch
      %33 = sbr.rel (0) target = $region13
    $region12: #{tpu_custom_call.1} parent=1 // pred_region
      %34 = dma.done [#allocation3], 128
    $region13: #{tpu_custom_call.1} parent=1 // pred_fallthru
      _
    // Predicated region
    $region14: #{tpu_custom_call.1} parent=1 // pred_check
      _
    $region15: #{tpu_custom_call.1} parent=1 // pred_check_branch
      %36 = sbr.rel (0) target = $region17
    $region16: #{tpu_custom_call.1} parent=1 // pred_region
      %37 = dma.done [#allocation6], 512
    $region17: #{tpu_custom_call.1} parent=1 // pred_fallthru
      _
    %v38 = vld [vmem:[#allocation2] sm:$0xff]
    %v39 = vld [vmem:[#allocation5] sm:$0xff]
    %vm40 = vcmask 64512
    %v42 = vsel %vm40, %v38, 0
    %44 = vmatprep.subr.mxu0 0.0
    %45 = vmatpush1.msra.mxu0 %v39
    %46 = vmatprep.subr.mxu0 0.0
    %47 = vmatpush1.msra.mxu0 0.0
    %48 = vmatprep.subr.mxu0 0.0
    %49 = vmatpush1.msra.mxu0 0.0
    %50 = vmatprep.subr.mxu0 0.0
    %51 = vmatpush1.msra.mxu0 0.0
    %52 = vmatprep.subr.mxu0 0.0
    %53 = vmatpush1.msra.mxu0 0.0
    %54 = vmatprep.subr.mxu0 0.0
    %55 = vmatpush1.msra.mxu0 0.0
    %56 = vmatprep.subr.mxu0 0.0
    %57 = vmatpush1.msra.mxu0 0.0
    %58 = vmatprep.subr.mxu0 0.0
    %59 = vmatpush1.msra.mxu0 0.0
    %60 = vmatprep.subr.mxu0 0.0
    %61 = vmatpush1.msra.mxu0 0.0
    %62 = vmatprep.subr.mxu0 0.0
    %63 = vmatpush1.msra.mxu0 0.0
    %64 = vmatprep.subr.mxu0 0.0
    %65 = vmatpush1.msra.mxu0 0.0
    %66 = vmatprep.subr.mxu0 0.0
    %67 = vmatpush1.msra.mxu0 0.0
    %68 = vmatprep.subr.mxu0 0.0
    %69 = vmatpush1.msra.mxu0 0.0
    %70 = vmatprep.subr.mxu0 0.0
    %71 = vmatpush1.msra.mxu0 0.0
    %72 = vmatprep.subr.mxu0 0.0
    %73 = vmatpush1.msra.mxu0 0.0
    %74 = vmatprep.subr.mxu0 0.0
    %75 = vmatpush1.msra.mxu0 0.0
    %76 = vmatprep.subr.mxu0 0.0
    %77 = vmatpush1.msra.mxu0 0.0
    %78 = vmatprep.subr.mxu0 0.0
    %79 = vmatpush1.msra.mxu0 0.0
    %80 = vmatprep.subr.mxu0 0.0
    %81 = vmatpush1.msra.mxu0 0.0
    %82 = vmatprep.subr.mxu0 0.0
    %83 = vmatpush1.msra.mxu0 0.0
    %84 = vmatprep.subr.mxu0 0.0
    %85 = vmatpush1.msra.mxu0 0.0
    %86 = vmatprep.subr.mxu0 0.0
    %87 = vmatpush1.msra.mxu0 0.0
    %88 = vmatprep.subr.mxu0 0.0
    %89 = vmatpush1.msra.mxu0 0.0
    %90 = vmatprep.subr.mxu0 0.0
    %91 = vmatpush1.msra.mxu0 0.0
    %92 = vmatprep.subr.mxu0 0.0
    %93 = vmatpush1.msra.mxu0 0.0
    %94 = vmatprep.subr.mxu0 0.0
    %95 = vmatpush1.msra.mxu0 0.0
    %96 = vmatprep.subr.mxu0 0.0
    %97 = vmatpush1.msra.mxu0 0.0
    %98 = vmatprep.subr.mxu0 0.0
    %99 = vmatpush1.msra.mxu0 0.0
    %100 = vmatprep.subr.mxu0 0.0
    %101 = vmatpush1.msra.mxu0 0.0
    %102 = vmatprep.subr.mxu0 0.0
    %103 = vmatpush1.msra.mxu0 0.0
    %104 = vmatprep.subr.mxu0 0.0
    %105 = vmatpush1.msra.mxu0 0.0
    %106 = vmatprep.subr.mxu0 0.0
    %107 = vmatpush1.msra.mxu0 0.0
    %108 = vmatprep.mubr.f32.mxu0 0.0
    %109 = vmatmul.mubr.f32.gmra.mrb[0].mxu0 %v42
    %v110 = vpop.f32.mrb[0].mxu0
    %v111 = vadd.f32 0.0, %v110
    %v112 = vpop.f32.mrb[0].mxu0
    %113 = vdwg.mxu0
    %v114 = vmax.f32 %v111, 0.0
    %s115 = scalar_lea.vmem [#allocation5], 8
    %v116 = vld [vmem:[%s115] sm:$0xff]
    %v118 = vsel %vm40, %v114, 0
    %120 = vmatprep.subr.mxu0 0.0
    %121 = vmatpush1.msra.mxu0 %v116
    %122 = vmatprep.subr.mxu0 0.0
    %123 = vmatpush1.msra.mxu0 0.0
    %124 = vmatprep.subr.mxu0 0.0
    %125 = vmatpush1.msra.mxu0 0.0
    %126 = vmatprep.subr.mxu0 0.0
    %127 = vmatpush1.msra.mxu0 0.0
    %128 = vmatprep.subr.mxu0 0.0
    %129 = vmatpush1.msra.mxu0 0.0
    %130 = vmatprep.subr.mxu0 0.0
    %131 = vmatpush1.msra.mxu0 0.0
    %132 = vmatprep.subr.mxu0 0.0
    %133 = vmatpush1.msra.mxu0 0.0
    %134 = vmatprep.subr.mxu0 0.0
    %135 = vmatpush1.msra.mxu0 0.0
    %136 = vmatprep.subr.mxu0 0.0
    %137 = vmatpush1.msra.mxu0 0.0
    %138 = vmatprep.subr.mxu0 0.0
    %139 = vmatpush1.msra.mxu0 0.0
    %140 = vmatprep.subr.mxu0 0.0
    %141 = vmatpush1.msra.mxu0 0.0
    %142 = vmatprep.subr.mxu0 0.0
    %143 = vmatpush1.msra.mxu0 0.0
    %144 = vmatprep.subr.mxu0 0.0
    %145 = vmatpush1.msra.mxu0 0.0
    %146 = vmatprep.subr.mxu0 0.0
    %147 = vmatpush1.msra.mxu0 0.0
    %148 = vmatprep.subr.mxu0 0.0
    %149 = vmatpush1.msra.mxu0 0.0
    %150 = vmatprep.subr.mxu0 0.0
    %151 = vmatpush1.msra.mxu0 0.0
    %152 = vmatprep.subr.mxu0 0.0
    %153 = vmatpush1.msra.mxu0 0.0
    %154 = vmatprep.subr.mxu0 0.0
    %155 = vmatpush1.msra.mxu0 0.0
    %156 = vmatprep.subr.mxu0 0.0
    %157 = vmatpush1.msra.mxu0 0.0
    %158 = vmatprep.subr.mxu0 0.0
    %159 = vmatpush1.msra.mxu0 0.0
    %160 = vmatprep.subr.mxu0 0.0
    %161 = vmatpush1.msra.mxu0 0.0
    %162 = vmatprep.subr.mxu0 0.0
    %163 = vmatpush1.msra.mxu0 0.0
    %164 = vmatprep.subr.mxu0 0.0
    %165 = vmatpush1.msra.mxu0 0.0
    %166 = vmatprep.subr.mxu0 0.0
    %167 = vmatpush1.msra.mxu0 0.0
    %168 = vmatprep.subr.mxu0 0.0
    %169 = vmatpush1.msra.mxu0 0.0
    %170 = vmatprep.subr.mxu0 0.0
    %171 = vmatpush1.msra.mxu0 0.0
    %172 = vmatprep.subr.mxu0 0.0
    %173 = vmatpush1.msra.mxu0 0.0
    %174 = vmatprep.subr.mxu0 0.0
    %175 = vmatpush1.msra.mxu0 0.0
    %176 = vmatprep.subr.mxu0 0.0
    %177 = vmatpush1.msra.mxu0 0.0
    %178 = vmatprep.subr.mxu0 0.0
    %179 = vmatpush1.msra.mxu0 0.0
    %180 = vmatprep.subr.mxu0 0.0
    %181 = vmatpush1.msra.mxu0 0.0
    %182 = vmatprep.subr.mxu0 0.0
    %183 = vmatpush1.msra.mxu0 0.0
    %184 = vmatprep.mubr.f32.mxu0 0.0
    %185 = vmatmul.mubr.f32.gmra.mrb[0].mxu0 %v118
    %v186 = vpop.f32.mrb[0].mxu0
    %v187 = vadd.f32 0.0, %v186
    %v188 = vpop.f32.mrb[0].mxu0
    %189 = vdwg.mxu0
    %v190 = vmax.f32 %v187, 0.0
    %s191 = scalar_lea.vmem [#allocation5], 16
    %v192 = vld [vmem:[%s191] sm:$0xff]
    %v194 = vsel %vm40, %v190, 0
    %196 = vmatprep.subr.mxu0 0.0
    %197 = vmatpush1.msra.mxu0 %v192
    %198 = vmatprep.subr.mxu0 0.0
    %199 = vmatpush1.msra.mxu0 0.0
    %200 = vmatprep.subr.mxu0 0.0
    %201 = vmatpush1.msra.mxu0 0.0
    %202 = vmatprep.subr.mxu0 0.0
    %203 = vmatpush1.msra.mxu0 0.0
    %204 = vmatprep.subr.mxu0 0.0
    %205 = vmatpush1.msra.mxu0 0.0
    %206 = vmatprep.subr.mxu0 0.0
    %207 = vmatpush1.msra.mxu0 0.0
    %208 = vmatprep.subr.mxu0 0.0
    %209 = vmatpush1.msra.mxu0 0.0
    %210 = vmatprep.subr.mxu0 0.0
    %211 = vmatpush1.msra.mxu0 0.0
    %212 = vmatprep.subr.mxu0 0.0
    %213 = vmatpush1.msra.mxu0 0.0
    %214 = vmatprep.subr.mxu0 0.0
    %215 = vmatpush1.msra.mxu0 0.0
    %216 = vmatprep.subr.mxu0 0.0
    %217 = vmatpush1.msra.mxu0 0.0
    %218 = vmatprep.subr.mxu0 0.0
    %219 = vmatpush1.msra.mxu0 0.0
    %220 = vmatprep.subr.mxu0 0.0
    %221 = vmatpush1.msra.mxu0 0.0
    %222 = vmatprep.subr.mxu0 0.0
    %223 = vmatpush1.msra.mxu0 0.0
    %224 = vmatprep.subr.mxu0 0.0
    %225 = vmatpush1.msra.mxu0 0.0
    %226 = vmatprep.subr.mxu0 0.0
    %227 = vmatpush1.msra.mxu0 0.0
    %228 = vmatprep.subr.mxu0 0.0
    %229 = vmatpush1.msra.mxu0 0.0
    %230 = vmatprep.subr.mxu0 0.0
    %231 = vmatpush1.msra.mxu0 0.0
    %232 = vmatprep.subr.mxu0 0.0
    %233 = vmatpush1.msra.mxu0 0.0
    %234 = vmatprep.subr.mxu0 0.0
    %235 = vmatpush1.msra.mxu0 0.0
    %236 = vmatprep.subr.mxu0 0.0
    %237 = vmatpush1.msra.mxu0 0.0
    %238 = vmatprep.subr.mxu0 0.0
    %239 = vmatpush1.msra.mxu0 0.0
    %240 = vmatprep.subr.mxu0 0.0
    %241 = vmatpush1.msra.mxu0 0.0
    %242 = vmatprep.subr.mxu0 0.0
    %243 = vmatpush1.msra.mxu0 0.0
    %244 = vmatprep.subr.mxu0 0.0
    %245 = vmatpush1.msra.mxu0 0.0
    %246 = vmatprep.subr.mxu0 0.0
    %247 = vmatpush1.msra.mxu0 0.0
    %248 = vmatprep.subr.mxu0 0.0
    %249 = vmatpush1.msra.mxu0 0.0
    %250 = vmatprep.subr.mxu0 0.0
    %251 = vmatpush1.msra.mxu0 0.0
    %252 = vmatprep.subr.mxu0 0.0
    %253 = vmatpush1.msra.mxu0 0.0
    %254 = vmatprep.subr.mxu0 0.0
    %255 = vmatpush1.msra.mxu0 0.0
    %256 = vmatprep.subr.mxu0 0.0
    %257 = vmatpush1.msra.mxu0 0.0
    %258 = vmatprep.subr.mxu0 0.0
    %259 = vmatpush1.msra.mxu0 0.0
    %260 = vmatprep.mubr.f32.mxu0 0.0
    %261 = vmatmul.mubr.f32.gmra.mrb[0].mxu0 %v194
    %v262 = vpop.f32.mrb[0].mxu0
    %v263 = vadd.f32 0.0, %v262
    %v264 = vpop.f32.mrb[0].mxu0
    %265 = vdwg.mxu0
    %v266 = vmax.f32 %v263, 0.0
    %s267 = scalar_lea.vmem [#allocation5], 24
    %v268 = vld [vmem:[%s267] sm:$0xff]
    %v270 = vsel %vm40, %v266, 0
    %272 = vmatprep.subr.mxu0 0.0
    %273 = vmatpush1.msra.mxu0 %v268
    %274 = vmatprep.subr.mxu0 0.0
    %275 = vmatpush1.msra.mxu0 0.0
    %276 = vmatprep.subr.mxu0 0.0
    %277 = vmatpush1.msra.mxu0 0.0
    %278 = vmatprep.subr.mxu0 0.0
    %279 = vmatpush1.msra.mxu0 0.0
    %280 = vmatprep.subr.mxu0 0.0
    %281 = vmatpush1.msra.mxu0 0.0
    %282 = vmatprep.subr.mxu0 0.0
    %283 = vmatpush1.msra.mxu0 0.0
    %284 = vmatprep.subr.mxu0 0.0
    %285 = vmatpush1.msra.mxu0 0.0
    %286 = vmatprep.subr.mxu0 0.0
    %287 = vmatpush1.msra.mxu0 0.0
    %288 = vmatprep.subr.mxu0 0.0
    %289 = vmatpush1.msra.mxu0 0.0
    %290 = vmatprep.subr.mxu0 0.0
    %291 = vmatpush1.msra.mxu0 0.0
    %292 = vmatprep.subr.mxu0 0.0
    %293 = vmatpush1.msra.mxu0 0.0
    %294 = vmatprep.subr.mxu0 0.0
    %295 = vmatpush1.msra.mxu0 0.0
    %296 = vmatprep.subr.mxu0 0.0
    %297 = vmatpush1.msra.mxu0 0.0
    %298 = vmatprep.subr.mxu0 0.0
    %299 = vmatpush1.msra.mxu0 0.0
    %300 = vmatprep.subr.mxu0 0.0
    %301 = vmatpush1.msra.mxu0 0.0
    %302 = vmatprep.subr.mxu0 0.0
    %303 = vmatpush1.msra.mxu0 0.0
    %304 = vmatprep.subr.mxu0 0.0
    %305 = vmatpush1.msra.mxu0 0.0
    %306 = vmatprep.subr.mxu0 0.0
    %307 = vmatpush1.msra.mxu0 0.0
    %308 = vmatprep.subr.mxu0 0.0
    %309 = vmatpush1.msra.mxu0 0.0
    %310 = vmatprep.subr.mxu0 0.0
    %311 = vmatpush1.msra.mxu0 0.0
    %312 = vmatprep.subr.mxu0 0.0
    %313 = vmatpush1.msra.mxu0 0.0
    %314 = vmatprep.subr.mxu0 0.0
    %315 = vmatpush1.msra.mxu0 0.0
    %316 = vmatprep.subr.mxu0 0.0
    %317 = vmatpush1.msra.mxu0 0.0
    %318 = vmatprep.subr.mxu0 0.0
    %319 = vmatpush1.msra.mxu0 0.0
    %320 = vmatprep.subr.mxu0 0.0
    %321 = vmatpush1.msra.mxu0 0.0
    %322 = vmatprep.subr.mxu0 0.0
    %323 = vmatpush1.msra.mxu0 0.0
    %324 = vmatprep.subr.mxu0 0.0
    %325 = vmatpush1.msra.mxu0 0.0
    %326 = vmatprep.subr.mxu0 0.0
    %327 = vmatpush1.msra.mxu0 0.0
    %328 = vmatprep.subr.mxu0 0.0
    %329 = vmatpush1.msra.mxu0 0.0
    %330 = vmatprep.subr.mxu0 0.0
    %331 = vmatpush1.msra.mxu0 0.0
    %332 = vmatprep.subr.mxu0 0.0
    %333 = vmatpush1.msra.mxu0 0.0
    %334 = vmatprep.subr.mxu0 0.0
    %335 = vmatpush1.msra.mxu0 0.0
    %336 = vmatprep.mubr.f32.mxu0 0.0
    %337 = vmatmul.mubr.f32.gmra.mrb[0].mxu0 %v270
    %v338 = vpop.f32.mrb[0].mxu0
    %v339 = vadd.f32 0.0, %v338
    %v340 = vpop.f32.mrb[0].mxu0
    %341 = vdwg.mxu0
    %v342 = vmax.f32 %v339, 0.0
    %343 = vst [vmem:[#allocation7] sm:$0xff] %v342
    // Predicated region
    $region18: #{tpu_custom_call.1} parent=1 // pred_check
      _
    $region19: #{tpu_custom_call.1} parent=1 // pred_check_branch
      %345 = sbr.rel (0) target = $region21
    $region20: #{tpu_custom_call.1} parent=1 // pred_region
      %s347 = ssub.s32 128, 128
      %348 = vsyncadd [#allocation4], %s347
      %s350 = sshll.u32 [#allocation7], 4
      %s351 = int_to_ptr.vmem [resolvable:$true] %s350
      %353 = dma.vmem_to_hbm [thread:$0]  %s351, 128, %s2, [#allocation4]
    $region21: #{tpu_custom_call.1} parent=1 // pred_fallthru
      _
    // Predicated region
    $region22: #{tpu_custom_call.1} parent=1 // pred_check
      _
    $region23: #{tpu_custom_call.1} parent=1 // pred_check_branch
      %355 = sbr.rel (0) target = $region25
    $region24: #{tpu_custom_call.1} parent=1 // pred_region
      %356 = dma.done [#allocation4], 128
    $region25: #{tpu_custom_call.1} parent=1 // pred_fallthru
      _
    %357 = vsyncpa [#allocation3], 1
    %358 = vsyncpa [#allocation6], 1
    %359 = vsyncpa [#allocation4], 1

</llo_original>
